<compile_context>
chip_gen: v7x
topology: tpu7x:2x2x1
jax: 0.10.0
libtpu: 0.0.40
codegen_flags: <defaults>
</compile_context>

<pallas_src>
import jax
import jax.numpy as jnp
from jax import lax
from jax.experimental import pallas as pl
from jax.experimental.pallas import tpu as pltpu


def _round_up(x, m):
    return (x + m - 1) // m * m


def _cdiv(a, b):
    return (a + b - 1) // b


def _make_matmul_kernel(k_minor):
    """Per-tile projection kernel.

    k_minor=True : p_ref is (tT, K), K on lanes  -> plain (M,K)@(K,N) dot.
    k_minor=False: p_ref is (K, tT), tokens on lanes -> contract LHS dim 0
                   (K is tiny in this branch, so any LHS relayout is cheap).
    """
    if k_minor:
        def kernel(p_ref, w_ref, b_ref, o_ref):
            acc = jnp.dot(p_ref[...], w_ref[...],
                          preferred_element_type=jnp.float32)      # (tT, Np) f32
            o_ref[...] = (acc + b_ref[...]).astype(o_ref.dtype)
    else:
        def kernel(p_ref, w_ref, b_ref, o_ref):
            acc = lax.dot_general(
                p_ref[...], w_ref[...],
                dimension_numbers=(((0,), (0,)), ((), ())),         # contract K
                preferred_element_type=jnp.float32)                 # (tT, Np) f32
            o_ref[...] = (acc + b_ref[...]).astype(o_ref.dtype)
    return kernel


def _choose_token_tile(B, T, K, Np, patch_bytes, out_bytes,
                       vmem_budget=24 * 1024 * 1024):
    """Largest token tile (multiple of 128, <=1024) fitting a conservative VMEM
    budget (double-buffered patches + output tiles, resident weight + bias),
    while keeping at least 2 grid steps so both v7x TensorCores are fed."""
    tT = min(1024, _round_up(max(T, 1), 128))

    def vmem_est(t):
        return (2 * (K * t * patch_bytes + t * Np * out_bytes)
                + K * Np * 2 + Np * 4)

    while tT > 128 and vmem_est(tT) > vmem_budget:
        tT -= 128
    if B * _cdiv(T, tT) < 2 and T > 128:
        tT = _round_up(_cdiv(T, 2), 128)
    return tT


def patch_embed_forward(x, weight, bias, patch_size, stride, spec_shape,
                        out_dtype=jnp.bfloat16):
    """x: (B, C, H, W) f32. weight: (d_model, C, P, P). bias: (d_model,).
    Returns (B, num_tokens, d_model) in out_dtype (f32 accumulation inside)."""
    assert stride < patch_size, "Overlap must be less than patch size"
    B, C, H, W = x.shape
    P = patch_size
    # Same formulas (and the same intentional H/W swap) as the PyTorch module:
    # freq_padding (from spec_shape[0]) pads W (last dim), time_padding (from
    # spec_shape[1]) pads H. Bug-for-bug with ZeroPad2d((0, fp, 0, tp)).
    freq_padding = (stride - (spec_shape[0] - P)) % stride
    time_padding = (stride - (spec_shape[1] - P)) % stride
    x_pad = jnp.pad(x, ((0, 0), (0, 0), (0, time_padding), (0, freq_padding)))
    Hp, Wp = x_pad.shape[2], x_pad.shape[3]
    Ho = (Hp - P) // stride + 1
    Wo = (Wp - P) // stride + 1
    T = Ho * Wo                       # num_tokens
    K = C * P * P                     # contraction dim
    N = weight.shape[0]               # d_model
    Np = _round_up(N, 128)            # lane-dense weight / output tiles

    # ---- patch extraction: cheap strided slices + stack (no HBM gather).
    # XLA fuses pad + slices + stack into one pass reading x once and writing
    # the bf16 patches array. The MXU consumes bf16; accumulation stays f32.
    x_lo = x_pad.astype(jnp.bfloat16)
    slices = []
    for dh in range(P):
        for dw in range(P):
            slices.append(
                x_lo[:, :,
                     dh: dh + (Ho - 1) * stride + 1: stride,
                     dw: dw + (Wo - 1) * stride + 1: stride])       # (B, C, Ho, Wo)

    # Layout choice: K on lanes when it is lane-dense enough (>=128), so the
    # kernel's dot needs no LHS transpose; tiny K keeps tokens on lanes so the
    # intermediate's minor dim stays wide and DMA-friendly.
    k_minor = K >= 128
    if k_minor:
        patches = jnp.stack(slices, axis=-1)                        # (B,C,Ho,Wo,P*P)
        patches = patches.transpose(0, 2, 3, 1, 4).reshape(B, T, K)  # k = c*P*P+dh*P+dw
    else:
        patches = jnp.stack(slices, axis=2).reshape(B, K, T)        # (B,C,P*P,Ho,Wo)

    # Projection weight (K, Np) bf16 + bias (1, Np) f32; resident in VMEM for
    # the whole grid (constant index_map). Np padding only when needed.
    w_mat = weight.reshape(N, K).T
    b_mat = bias.reshape(1, N).astype(jnp.float32)
    if Np != N:
        w_mat = jnp.pad(w_mat, ((0, 0), (0, Np - N)))
        b_mat = jnp.pad(b_mat, ((0, 0), (0, Np - N)))
    w_mat = w_mat.astype(jnp.bfloat16)

    out_bytes = jnp.dtype(out_dtype).itemsize
    tT = _choose_token_tile(B, T, K, Np, patch_bytes=2, out_bytes=out_bytes)
    n_t = _cdiv(T, tT)

    if k_minor:
        p_spec = pl.BlockSpec((None, tT, K), lambda b, t: (b, t, 0))
    else:
        p_spec = pl.BlockSpec((None, K, tT), lambda b, t: (b, 0, t))

    cost = pl.CostEstimate(
        flops=2 * B * T * K * Np,
        transcendentals=0,
        bytes_accessed=(B * K * T * 2 + K * Np * 2 + Np * 4
                        + B * T * Np * out_bytes))

    out = pl.pallas_call(
        _make_matmul_kernel(k_minor),
        out_shape=jax.ShapeDtypeStruct((B, T, Np), out_dtype),
        grid_spec=pltpu.PrefetchScalarGridSpec(
            num_scalar_prefetch=0,
            grid=(B, n_t),
            in_specs=[
                p_spec,                                         # patches tile
                pl.BlockSpec((K, Np), lambda b, t: (0, 0)),     # weight (resident)
                pl.BlockSpec((1, Np), lambda b, t: (0, 0)),     # bias   (resident)
            ],
            # Boundary token block is masked on store -> no Tp padding and no
            # epilogue un-pad copy of the (dominant) output array.
            out_specs=pl.BlockSpec((None, tT, Np), lambda b, t: (b, t, 0)),
        ),
        compiler_params=pltpu.CompilerParams(
            dimension_semantics=("parallel", "parallel")),
        cost_estimate=cost,
    )(patches, w_mat, b_mat)

    if Np != N:   # only when d_model is not a multiple of 128
        out = out[..., :N]
    return out


def _reference(x, weight, bias, patch_size, stride, spec_shape):
    """f32 reference matching the PyTorch forward exactly."""
    freq_padding = (stride - (spec_shape[0] - patch_size)) % stride
    time_padding = (stride - (spec_shape[1] - patch_size)) % stride
    x_pad = jnp.pad(x, ((0, 0), (0, 0), (0, time_padding), (0, freq_padding)))
    ref = lax.conv_general_dilated(
        x_pad, weight, window_strides=(stride, stride), padding="VALID",
        dimension_numbers=("NCHW", "OIHW", "NCHW"))
    ref = ref + bias[None, :, None, None]
    B, N = x.shape[0], weight.shape[0]
    return ref.reshape(B, N, -1).transpose(0, 2, 1)   # flatten(2).transpose(1,2)


if __name__ == "__main__":
    fwd = jax.jit(patch_embed_forward, static_argnums=(3, 4, 5, 6))

    configs = [
        # (patch_size, stride, in_channels, d_model, spec_shape, batch)
        (4, 2, 1, 32, (15, 13), 2),    # K=16: tokens-on-lanes path, nonzero padding
        (8, 4, 2, 256, (28, 24), 2),   # K=128: K-on-lanes path, d_model % 128 == 0
    ]
    for (patch_size, stride, in_channels, d_model, spec_shape, B) in configs:
        key = jax.random.PRNGKey(0)
        kx, kw, kb = jax.random.split(key, 3)
        x = jax.random.normal(kx, (B, in_channels, *spec_shape), dtype=jnp.float32)

        # Deterministic Conv2d-style init (uniform in +/- 1/sqrt(fan_in)).
        fan_in = in_channels * patch_size * patch_size
        bound = 1.0 / (fan_in ** 0.5)
        weight = jax.random.uniform(
            kw, (d_model, in_channels, patch_size, patch_size),
            minval=-bound, maxval=bound, dtype=jnp.float32)
        bias = jax.random.uniform(
            kb, (d_model,), minval=-bound, maxval=bound, dtype=jnp.float32)

        out = fwd(x, weight, bias, patch_size, stride, spec_shape, jnp.bfloat16)
        out = jax.block_until_ready(out)

        ref = _reference(x, weight, bias, patch_size, stride, spec_shape)
        assert out.shape == ref.shape, (out.shape, ref.shape)
        assert out.dtype == jnp.bfloat16
        # Tolerance vs the f32 reference reflects bf16 MXU inputs and the bf16
        # output store (accumulation stays f32).
        assert jnp.allclose(out.astype(jnp.float32), ref, atol=3e-2, rtol=3e-2), (
            "mismatch vs reference conv for config "
            f"{(patch_size, stride, in_channels, d_model, spec_shape)}")

    print("KERNEL_OK")
</pallas_src>

<mosaic_0001>
module attributes {stable_mosaic.version = 11 : i64} {
  func.func @kernel(%arg0: i32, %arg1: i32, %arg2: memref<1x16x128xbf16, #tpu.memory_space<vmem>>, %arg3: memref<16x128xbf16, #tpu.memory_space<vmem>>, %arg4: memref<1x128xf32, #tpu.memory_space<vmem>>, %arg5: memref<1x128x128xbf16, #tpu.memory_space<vmem>>) attributes {dimension_semantics = [#tpu.dimension_semantics<parallel>, #tpu.dimension_semantics<parallel>], iteration_bounds = array<i64: 2, 1>, scalar_prefetch = 0 : i64, scratch_operands = 0 : i64, tpu.core_type = #tpu.core_type<tc>, window_params = [{transform_indices = @transform_0, window_bounds = array<i64: 1, 16, 128>}, {pipeline_mode = #tpu.pipeline_mode<synchronous>, transform_indices = @transform_1, window_bounds = array<i64: 16, 128>}, {pipeline_mode = #tpu.pipeline_mode<synchronous>, transform_indices = @transform_2, window_bounds = array<i64: 1, 128>}, {transform_indices = @transform_3, window_bounds = array<i64: 1, 128, 128>}]} {
    %c0 = arith.constant 0 : index
    %c0_0 = arith.constant 0 : index
    %c0_1 = arith.constant 0 : index
    %0 = vector.load %arg2[%c0, %c0_0, %c0_1] : memref<1x16x128xbf16, #tpu.memory_space<vmem>>, vector<1x16x128xbf16>
    %1 = vector.shape_cast %0 : vector<1x16x128xbf16> to vector<16x128xbf16>
    %c0_2 = arith.constant 0 : index
    %c0_3 = arith.constant 0 : index
    %2 = vector.load %arg3[%c0_2, %c0_3] : memref<16x128xbf16, #tpu.memory_space<vmem>>, vector<16x128xbf16>
    %cst = arith.constant dense<0.000000e+00> : vector<128x128xf32>
    %3 = tpu.matmul %1, %2, %cst {dimension_numbers = #tpu.dot_dimension_numbers<[0], [0], [1], [1], [0, 1, 1, 1], [], []>} : vector<16x128xbf16>, vector<16x128xbf16>, vector<128x128xf32> -> vector<128x128xf32>
    %c0_4 = arith.constant 0 : index
    %c0_5 = arith.constant 0 : index
    %4 = vector.load %arg4[%c0_4, %c0_5] : memref<1x128xf32, #tpu.memory_space<vmem>>, vector<1x128xf32>
    %5 = vector.broadcast %4 : vector<1x128xf32> to vector<128x128xf32>
    %6 = arith.addf %3, %5 : vector<128x128xf32>
    %7 = arith.truncf %6 : vector<128x128xf32> to vector<128x128xbf16>
    %c0_6 = arith.constant 0 : index
    %c0_7 = arith.constant 0 : index
    %c0_8 = arith.constant 0 : index
    %8 = vector.load %arg5[%c0_6, %c0_7, %c0_8] : memref<1x128x128xbf16, #tpu.memory_space<vmem>>, vector<1x128x128xbf16>
    %9 = vector.shape_cast %8 : vector<1x128x128xbf16> to vector<128x128xbf16>
    %10 = vector.shape_cast %7 : vector<128x128xbf16> to vector<1x128x128xbf16>
    tpu.vector_store %arg5[%c0_6, %c0_7, %c0_8], %10 {strides = array<i32>} : memref<1x128x128xbf16, #tpu.memory_space<vmem>>, vector<1x128x128xbf16>,
    return
  }
  func.func @transform_0(%arg0: i32, %arg1: i32) -> (i32, i32, i32) {
    %c0_i32 = arith.constant 0 : i32
    %c0_i32_0 = arith.constant 0 : i32
    return %arg0, %c0_i32, %arg1 : i32, i32, i32
  }
  func.func @transform_1(%arg0: i32, %arg1: i32) -> (i32, i32) {
    %c0_i32 = arith.constant 0 : i32
    %c0_i32_0 = arith.constant 0 : i32
    %c0_i32_1 = arith.constant 0 : i32
    return %c0_i32, %c0_i32_0 : i32, i32
  }
  func.func @transform_2(%arg0: i32, %arg1: i32) -> (i32, i32) {
    %c0_i32 = arith.constant 0 : i32
    %c0_i32_0 = arith.constant 0 : i32
    %c0_i32_1 = arith.constant 0 : i32
    return %c0_i32, %c0_i32_0 : i32, i32
  }
  func.func @transform_3(%arg0: i32, %arg1: i32) -> (i32, i32, i32) {
    %c0_i32 = arith.constant 0 : i32
    %c0_i32_0 = arith.constant 0 : i32
    return %arg0, %arg1, %c0_i32 : i32, i32, i32
  }
}

</mosaic_0001>

<llo_original>
// kernel: patch_embed_forward.1
$region0: #{patch_embed_forward.1}
  #allocation0 [shape = 'u32[]', space=smem, size = 0x4, offset = 0x4, fixed_abs, tag = 'smem constant byte address 0x4 - core index']
  #allocation1 [shape = 'u32[144,128]{1,0:T(1,128)}', space=vmem, size = 0x12000, scoped, tag = 'internal scratch']
  %s0 = inlined_call_operand.vmem [shape: bf16[2,16,42], index: 0, kind: input, shape index: {}]
  %s1 = inlined_call_operand.vmem [shape: bf16[16,128], index: 1, kind: input, shape index: {}]
  %s2 = inlined_call_operand.vmem [shape: f32[1,128], index: 2, kind: input, shape index: {}]
  %s3 = inlined_call_operand.vmem [shape: bf16[2,42,128], index: 3, kind: output, shape index: {}]
  %s4 = sld [smem:[#allocation0]]
  $region89: #{patch_embed_forward.1} parent=0
    _
  %s6 = ssub.s32 1, %s4
  %s7 = scalar_select 0, %s6, %s4
  $region1: #{patch_embed_forward.1} parent=0
    #allocation2 [shape = 'u8[65536]{0}', space=vmem, size = 0x10000, scoped, tag = 'output window, operand 0']
    loop: start=0, step=1, limit=4
    $region2: #{patch_embed_forward.1} parent=1 // loop_pre_header
      _
    $region3: #{patch_embed_forward.1} parent=1 // loop_header
      %s9 = sphi 0, %s13
      %p10 = scmp.ge.s32.totalorder %s9, 4
      %s16 = sphi 0, %s28
      %s17 = sphi 0, %s24
      %s18 = sphi 0, %s16
      %s19 = sphi 0, %s17
      %s20 = sphi 0, %s18
      %s21 = sphi 0, %s19
      %s33 = sphi 0, %s35
      %s36 = sphi 0, %s33
      %s37 = sphi 0, %s36
      %s53 = sphi 0, %s37
      %s57 = sphi 0, %s57
      %s59 = sphi 0, %s57
      %s60 = sphi 0, %s59
      %s74 = sphi 0, %s60
      %s78 = sphi 0, %s78
      %s80 = sphi 0, %s78
      %s81 = sphi 0, %s80
      %s95 = sphi 0, %s81
      %s103 = sphi 0, %s105
      %s106 = sphi 0, %s103
      %s107 = sphi 0, %s106
      %s123 = sphi 0, %s107
    $region4: #{patch_embed_forward.1} parent=1 // loop_header_branch
      %12 = sbr.rel (%p10) target = $region8
    $region5: #{patch_embed_forward.1} parent=1 // loop_body
      %s14 = ssub.s32 %s9, 1
      %s15 = ssub.s32 %s9, 2
      %s22 = sadd.s32 1, %s17
      %p23 = scmp.ge.s32.totalorder %s22, 1
      %s24 = scalar_select %p23, 0, %s22
      %s25 = sadd.s32 1, %s16
      %s26 = scalar_select %p23, %s25, %s16
      %p27 = scmp.ge.s32.totalorder %s26, 2
      %s28 = scalar_select %p27, 0, %s26
      %s29 = ssub.s32 %s16, %s28
      %s30 = ssub.s32 %s17, %s24
      %s31 = sor.u32 %s29, %s30
      %p32 = scmp.eq.s32.totalorder %s31, 0
      %s34 = sadd.s32 %s33, 1
      %s35 = scalar_select %p32, %s33, %s34
      %p38 = pneg %p32
      %p39 = scmp.eq.s32.totalorder %s9, 1
      %p40 = por %p38, %p39
      %p41 = scmp.ne.s32.totalorder %s33, %s36
      %p42 = scmp.eq.s32.totalorder %s9, 0
      %p43 = por %p41, %p42
      %p44 = scmp.ne.s32.totalorder %s33, %s36
      %p45 = scmp.eq.s32.totalorder %s14, 1
      %p46 = por %p44, %p45
      %p47 = scmp.ne.s32.totalorder %s36, %s37
      %p48 = scmp.eq.s32.totalorder %s14, 0
      %p49 = por %p47, %p48
      %p50 = scmp.ne.s32.totalorder %s36, %s37
      %p51 = scmp.eq.s32.totalorder %s15, 1
      %p52 = por %p50, %p51
      %p54 = scmp.ne.s32.totalorder %s37, %s53
      %p55 = scmp.eq.s32.totalorder %s15, 0
      %p56 = por %p54, %p55
      %s58 = sadd.s32 %s57, 1
      %p61 = scmp.eq.s32.totalorder %s9, 1
      %p62 = scmp.ne.s32.totalorder %s57, %s59
      %p63 = scmp.eq.s32.totalorder %s9, 0
      %p64 = por %p62, %p63
      %p65 = scmp.ne.s32.totalorder %s57, %s59
      %p66 = scmp.eq.s32.totalorder %s14, 1
      %p67 = por %p65, %p66
      %p68 = scmp.ne.s32.totalorder %s59, %s60
      %p69 = scmp.eq.s32.totalorder %s14, 0
      %p70 = por %p68, %p69
      %p71 = scmp.ne.s32.totalorder %s59, %s60
      %p72 = scmp.eq.s32.totalorder %s15, 1
      %p73 = por %p71, %p72
      %p75 = scmp.ne.s32.totalorder %s60, %s74
      %p76 = scmp.eq.s32.totalorder %s15, 0
      %p77 = por %p75, %p76
      %s79 = sadd.s32 %s78, 1
      %p82 = scmp.eq.s32.totalorder %s9, 1
      %p83 = scmp.ne.s32.totalorder %s78, %s80
      %p84 = scmp.eq.s32.totalorder %s9, 0
      %p85 = por %p83, %p84
      %p86 = scmp.ne.s32.totalorder %s78, %s80
      %p87 = scmp.eq.s32.totalorder %s14, 1
      %p88 = por %p86, %p87
      %p89 = scmp.ne.s32.totalorder %s80, %s81
      %p90 = scmp.eq.s32.totalorder %s14, 0
      %p91 = por %p89, %p90
      %p92 = scmp.ne.s32.totalorder %s80, %s81
      %p93 = scmp.eq.s32.totalorder %s15, 1
      %p94 = por %p92, %p93
      %p96 = scmp.ne.s32.totalorder %s81, %s95
      %p97 = scmp.eq.s32.totalorder %s15, 0
      %p98 = por %p96, %p97
      %s99 = ssub.s32 %s16, %s28
      %s100 = ssub.s32 %s17, %s24
      %s101 = sor.u32 %s99, %s100
      %p102 = scmp.eq.s32.totalorder %s101, 0
      %s104 = sadd.s32 %s103, 1
      %s105 = scalar_select %p102, %s103, %s104
      %p108 = pneg %p102
      %p109 = scmp.eq.s32.totalorder %s9, 1
      %p110 = por %p108, %p109
      %p111 = scmp.ne.s32.totalorder %s103, %s106
      %p112 = scmp.eq.s32.totalorder %s9, 0
      %p113 = por %p111, %p112
      %p114 = scmp.ne.s32.totalorder %s103, %s106
      %p115 = scmp.eq.s32.totalorder %s14, 1
      %p116 = por %p114, %p115
      %p117 = scmp.ne.s32.totalorder %s106, %s107
      %p118 = scmp.eq.s32.totalorder %s14, 0
      %p119 = por %p117, %p118
      %p120 = scmp.ne.s32.totalorder %s106, %s107
      %p121 = scmp.eq.s32.totalorder %s15, 1
      %p122 = por %p120, %p121
      %p124 = scmp.ne.s32.totalorder %s107, %s123
      %p125 = scmp.eq.s32.totalorder %s15, 0
      %p126 = por %p124, %p125
      %p127 = scmp.le.s32.totalorder 1, %s9
      %p128 = scmp.lt.s32.totalorder %s9, 3
      %p129 = pnand %p127, %p128
      %p130 = pneg %p129
      // Predicated region
      $region9: #{patch_embed_forward.1} parent=5 // pred_check
        _
      $region10: #{patch_embed_forward.1} parent=5 // pred_check_branch
        %132 = sbr.rel (%p129) target = $region12
      $region11: #{patch_embed_forward.1} parent=5 // pred_region
        %s133 = ssub.s32 %s9, 1
        // Predicated region
        $region13: #{patch_embed_forward.1} parent=11 // pred_check
          %p134 = pneg %p70
        $region14: #{patch_embed_forward.1} parent=11 // pred_check_branch
          %136 = sbr.rel (%p134) target = $region16
        $region15: #{patch_embed_forward.1} parent=11 // pred_region
          _
        $region16: #{patch_embed_forward.1} parent=11 // pred_fallthru
          _
        // Predicated region
        $region17: #{patch_embed_forward.1} parent=11 // pred_check
          %p137 = pneg %p91
        $region18: #{patch_embed_forward.1} parent=11 // pred_check_branch
          %139 = sbr.rel (%p137) target = $region20
        $region19: #{patch_embed_forward.1} parent=11 // pred_region
          _
        $region20: #{patch_embed_forward.1} parent=11 // pred_fallthru
          _
      $region12: #{patch_embed_forward.1} parent=5 // pred_fallthru
        _
      %p140 = scmp.lt.s32.totalorder %s9, 2
      // Predicated region
      $region21: #{patch_embed_forward.1} parent=5 // pred_check
        %p141 = pneg %p140
      $region22: #{patch_embed_forward.1} parent=5 // pred_check_branch
        %143 = sbr.rel (%p141) target = $region24
      $region23: #{patch_embed_forward.1} parent=5 // pred_region
        // Predicated region
        $region25: #{patch_embed_forward.1} parent=23 // pred_check
          %p144 = pneg %p43
        $region26: #{patch_embed_forward.1} parent=23 // pred_check_branch
          %146 = sbr.rel (%p144) target = $region28
        $region27: #{patch_embed_forward.1} parent=23 // pred_region
          %p147 = scmp.lt.s32.totalorder %s16, 1
          %s148 = scalar_select %p147, %s16, 1
          %p149 = scmp.lt.s32.totalorder %s17, 0
          %s150 = scalar_select %p149, %s17, 0
          %s151 = smul.addr %s148, 2
          %s152 = sadd.s32 %s150, %s151
          %s153 = smul.addr %s152, 4
          %s154 = scalar_lea.vmem %s0, %s153
        $region28: #{patch_embed_forward.1} parent=23 // pred_fallthru
          _
      $region24: #{patch_embed_forward.1} parent=5 // pred_fallthru
        _
      %p155 = scmp.le.s32.totalorder 1, %s9
      %p156 = scmp.lt.s32.totalorder %s9, 3
      %p157 = pnand %p155, %p156
      %p158 = pneg %p157
      // Predicated region
      $region29: #{patch_embed_forward.1} parent=5 // pred_check
        _
      $region30: #{patch_embed_forward.1} parent=5 // pred_check_branch
        %160 = sbr.rel (%p157) target = $region32
      $region31: #{patch_embed_forward.1} parent=5 // pred_region
        %s161 = ssub.s32 %s9, 1
        %p162 = scmp.lt.s32.totalorder %s18, 1
        %s163 = scalar_select %p162, %s18, 1
        %p164 = scmp.lt.s32.totalorder %s19, 0
        %s165 = scalar_select %p164, %s19, 0
        %s166 = smul.addr %s163, 2
        %s167 = sadd.s32 %s165, %s166
        %s168 = smul.addr %s167, 4
        %s169 = scalar_lea.vmem %s0, %s168
        %p170 = pneg %p49
        %p171 = pneg %p46
        %p172 = pneg %p70
        %p173 = pneg %p67
        %p174 = pneg %p91
        %p175 = pneg %p88
        %p176 = pneg %p119
        %p177 = pneg %p116
        %s178 = sand.u32 %s106, 1
        %s179 = sand.u32 %s106, 1
        %s180 = smul.addr %s179, 64
        %s181 = scalar_lea.vmem [#allocation2], %s180
        %p182 = scmp.lt.s32.totalorder %s18, 1
        %s183 = scalar_select %p182, %s18, 1
        %p184 = scmp.lt.s32.totalorder %s19, 0
        %s185 = scalar_select %p184, %s19, 0
        %s186 = smul.addr %s183, 2
        %s187 = sadd.s32 %s185, %s186
        %s188 = smul.addr %s187, 4
        %s189 = scalar_lea.vmem %s0, %s188
        %s190 = smul.u32 16, %s19
        %s191 = ssub.s32 6, %s190
        %s192 = smul.u32 64, %s191
        %v194 = vld [vmem:[%s189] sm:$0xf]
        %v195 = vld [vmem:[%s189 + $0x4] sm:$0xf]
        %v196 = vld [vmem:[%s1] sm:$0xf]
        %v197 = vld [vmem:[%s1 + $0x4] sm:$0xf]
        %v198 = vld [vmem:[%s2] sm:$0x1]
        %v200 = vlaneseq
        %v201 = vshrl.u32 %v200, 7
        %v202 = vsub.s32 0, %v201
        %v203 = vrot.slane %v198, %v202
        %v207 = vunpack.c.l.b16 %v194
        %v208 = vunpack.c.l.b16 %v195
        %v209 = vpack.c.b16 %v208, %v207
        %211 = vxpose.xlu0.c.b16.start [1/8] %v209, 128
        %212 = vxpose.xlu0.c.b16.cont [2/8] 0, 128
        %213 = vxpose.xlu0.c.b16.cont [3/8] 0, 128
        %214 = vxpose.xlu0.c.b16.cont [4/8] 0, 128
        %215 = vxpose.xlu0.c.b16.cont [5/8] 0, 128
        %216 = vxpose.xlu0.c.b16.cont [6/8] 0, 128
        %217 = vxpose.xlu0.c.b16.cont [7/8] 0, 128
        %218 = vxpose.xlu0.c.b16.end [8/8] 0, 128
        %v219 = vpop.trf.xlu0
        %v220 = vpop.trf.xlu0
        %v221 = vpop.trf.xlu0
        %v222 = vpop.trf.xlu0
        %v223 = vpop.trf.xlu0
        %v224 = vpop.trf.xlu0
        %v225 = vpop.trf.xlu0
        %v226 = vpop.trf.xlu0
        %v229 = vunpack.c.l.b16 %v196
        %v230 = vunpack.c.l.b16 %v197
        %v231 = vpack.c.b16 %v230, %v229
        %vm233 = vcmask 130048
        %v235 = vsel %vm233, %v219, 0
        %v238 = vsel %vm233, %v220, 0
        %v241 = vsel %vm233, %v221, 0
        %v244 = vsel %vm233, %v222, 0
        %v247 = vsel %vm233, %v223, 0
        %v250 = vsel %vm233, %v224, 0
        %v253 = vsel %vm233, %v225, 0
        %v256 = vsel %vm233, %v226, 0
        %258 = vmatprep.subr.bf16.mxu0 0
        %259 = vmatpush1.bf16.msra.mxu0 %v231
        %260 = vmatprep.subr.bf16.mxu0 0
        %261 = vmatpush1.bf16.msra.mxu0 0
        %262 = vmatprep.subr.bf16.mxu0 0
        %263 = vmatpush1.bf16.msra.mxu0 0
        %264 = vmatprep.subr.bf16.mxu0 0
        %265 = vmatpush1.bf16.msra.mxu0 0
        %266 = vmatprep.subr.bf16.mxu0 0
        %267 = vmatpush1.bf16.msra.mxu0 0
        %268 = vmatprep.subr.bf16.mxu0 0
        %269 = vmatpush1.bf16.msra.mxu0 0
        %270 = vmatprep.subr.bf16.mxu0 0
        %271 = vmatpush1.bf16.msra.mxu0 0
        %272 = vmatprep.subr.bf16.mxu0 0
        %273 = vmatpush1.bf16.msra.mxu0 0
        %274 = vmatprep.subr.bf16.mxu0 0
        %275 = vmatpush1.bf16.msra.mxu0 0
        %276 = vmatprep.subr.bf16.mxu0 0
        %277 = vmatpush1.bf16.msra.mxu0 0
        %278 = vmatprep.subr.bf16.mxu0 0
        %279 = vmatpush1.bf16.msra.mxu0 0
        %280 = vmatprep.subr.bf16.mxu0 0
        %281 = vmatpush1.bf16.msra.mxu0 0
        %282 = vmatprep.subr.bf16.mxu0 0
        %283 = vmatpush1.bf16.msra.mxu0 0
        %284 = vmatprep.subr.bf16.mxu0 0
        %285 = vmatpush1.bf16.msra.mxu0 0
        %286 = vmatprep.subr.bf16.mxu0 0
        %287 = vmatpush1.bf16.msra.mxu0 0
        %288 = vmatprep.subr.bf16.mxu0 0
        %289 = vmatpush1.bf16.msra.mxu0 0
        %290 = vmatprep.mubr.bf16.mxu0 0
        %291 = vmatmul.mubr.bf16.gmra.mrb[0].mxu0 %v235
        %v292 = vpop.f32.mrb[0].mxu0
        %v293 = vadd.f32 %v203, %v292
        %v294 = vpop.f32.mrb[0].mxu0
        %v295 = vpop.f32.mrb[0].mxu0
        %v296 = vadd.f32 %v203, %v295
        %v297 = vpop.f32.mrb[0].mxu0
        %298 = vmatprep.mubr.bf16.mxu0 0
        %299 = vmatmul.mubr.bf16.gmra.mrb[0].mxu0 %v238
        %v300 = vpop.f32.mrb[0].mxu0
        %v301 = vadd.f32 %v203, %v300
        %v302 = vpop.f32.mrb[0].mxu0
        %v303 = vpop.f32.mrb[0].mxu0
        %v304 = vadd.f32 %v203, %v303
        %v305 = vpop.f32.mrb[0].mxu0
        %306 = vmatprep.mubr.bf16.mxu0 0
        %307 = vmatmul.mubr.bf16.gmra.mrb[0].mxu0 %v241
        %v308 = vpop.f32.mrb[0].mxu0
        %v309 = vadd.f32 %v203, %v308
        %v310 = vpop.f32.mrb[0].mxu0
        %v311 = vpop.f32.mrb[0].mxu0
        %v312 = vadd.f32 %v203, %v311
        %v313 = vpop.f32.mrb[0].mxu0
        %314 = vmatprep.mubr.bf16.mxu0 0
        %315 = vmatmul.mubr.bf16.gmra.mrb[0].mxu0 %v244
        %v316 = vpop.f32.mrb[0].mxu0
        %v317 = vadd.f32 %v203, %v316
        %v318 = vpop.f32.mrb[0].mxu0
        %v319 = vpop.f32.mrb[0].mxu0
        %v320 = vadd.f32 %v203, %v319
        %v321 = vpop.f32.mrb[0].mxu0
        %322 = vmatprep.mubr.bf16.mxu0 0
        %323 = vmatmul.mubr.bf16.gmra.mrb[0].mxu0 %v247
        %v324 = vpop.f32.mrb[0].mxu0
        %v325 = vadd.f32 %v203, %v324
        %v326 = vpop.f32.mrb[0].mxu0
        %v327 = vpop.f32.mrb[0].mxu0
        %v328 = vadd.f32 %v203, %v327
        %v329 = vpop.f32.mrb[0].mxu0
        %330 = vmatprep.mubr.bf16.mxu0 0
        %331 = vmatmul.mubr.bf16.gmra.mrb[0].mxu0 %v250
        %v332 = vpop.f32.mrb[0].mxu0
        %v333 = vadd.f32 %v203, %v332
        %v334 = vpop.f32.mrb[0].mxu0
        %v335 = vpop.f32.mrb[0].mxu0
        %v336 = vadd.f32 %v203, %v335
        %v337 = vpop.f32.mrb[0].mxu0
        %338 = vmatprep.mubr.bf16.mxu0 0
        %339 = vmatmul.mubr.bf16.gmra.mrb[0].mxu0 %v253
        %v340 = vpop.f32.mrb[0].mxu0
        %v341 = vadd.f32 %v203, %v340
        %v342 = vpop.f32.mrb[0].mxu0
        %v343 = vpop.f32.mrb[0].mxu0
        %v344 = vadd.f32 %v203, %v343
        %v345 = vpop.f32.mrb[0].mxu0
        %346 = vmatprep.mubr.bf16.mxu0 0
        %347 = vmatmul.mubr.bf16.gmra.mrb[0].mxu0 %v256
        %v348 = vpop.f32.mrb[0].mxu0
        %v349 = vadd.f32 %v203, %v348
        %v350 = vpop.f32.mrb[0].mxu0
        %v351 = vpop.f32.mrb[0].mxu0
        %v352 = vadd.f32 %v203, %v351
        %v353 = vpop.f32.mrb[0].mxu0
        %354 = vdwg.mxu0
        %v355 = vpack.c.bf16 %v296, %v293
        %v356 = vpack.c.bf16 %v304, %v301
        %v357 = vpack.c.bf16 %v312, %v309
        %v358 = vpack.c.bf16 %v320, %v317
        %v359 = vpack.c.bf16 %v328, %v325
        %v360 = vpack.c.bf16 %v336, %v333
        %v361 = vpack.c.bf16 %v344, %v341
        %v362 = vpack.c.bf16 %v352, %v349
        %v371 = vunpack.c.l.b16 %v355
        %v372 = vunpack.c.h.b16 %v355
        %v373 = vunpack.c.l.b16 %v356
        %v374 = vunpack.c.h.b16 %v356
        %v375 = vunpack.c.l.b16 %v357
        %v376 = vunpack.c.h.b16 %v357
        %v377 = vunpack.c.l.b16 %v358
        %v378 = vunpack.c.h.b16 %v358
        %v379 = vunpack.c.l.b16 %v359
        %v380 = vunpack.c.h.b16 %v359
        %v381 = vunpack.c.l.b16 %v360
        %v382 = vunpack.c.h.b16 %v360
        %v383 = vunpack.c.l.b16 %v361
        %v384 = vunpack.c.h.b16 %v361
        %v385 = vunpack.c.l.b16 %v362
        %v386 = vunpack.c.h.b16 %v362
        %v387 = vpack.c.b16 %v371, %v371
        %v388 = vpack.c.b16 %v372, %v372
        %v389 = vpack.c.b16 %v373, %v373
        %v390 = vpack.c.b16 %v374, %v374
        %v391 = vpack.c.b16 %v375, %v375
        %v392 = vpack.c.b16 %v376, %v376
        %v393 = vpack.c.b16 %v377, %v377
        %v394 = vpack.c.b16 %v378, %v378
        %v395 = vpack.c.b16 %v379, %v379
        %v396 = vpack.c.b16 %v380, %v380
        %v397 = vpack.c.b16 %v381, %v381
        %v398 = vpack.c.b16 %v382, %v382
        %v399 = vpack.c.b16 %v383, %v383
        %v400 = vpack.c.b16 %v384, %v384
        %v401 = vpack.c.b16 %v385, %v385
        %v402 = vpack.c.b16 %v386, %v386
        %419 = vst [vmem:[%s181] sm:$0xf] %v387
        %420 = vst [vmem:[%s181 + $0x4] sm:$0xf] %v388
        %421 = vst [vmem:[%s181 + $0x8] sm:$0xf] %v389
        %422 = vst [vmem:[%s181 + $0xc] sm:$0xf] %v390
        %423 = vst [vmem:[%s181 + $0x10] sm:$0xf] %v391
        %424 = vst [vmem:[%s181 + $0x14] sm:$0xf] %v392
        %425 = vst [vmem:[%s181 + $0x18] sm:$0xf] %v393
        %426 = vst [vmem:[%s181 + $0x1c] sm:$0xf] %v394
        %427 = vst [vmem:[%s181 + $0x20] sm:$0xf] %v395
        %428 = vst [vmem:[%s181 + $0x24] sm:$0xf] %v396
        %429 = vst [vmem:[%s181 + $0x28] sm:$0xf] %v397
        %430 = vst [vmem:[%s181 + $0x2c] sm:$0xf] %v398
        %431 = vst [vmem:[%s181 + $0x30] sm:$0xf] %v399
        %432 = vst [vmem:[%s181 + $0x34] sm:$0xf] %v400
        %433 = vst [vmem:[%s181 + $0x38] sm:$0xf] %v401
        %434 = vst [vmem:[%s181 + $0x3c] sm:$0xf] %v402
        %s435 = sand.u32 %s106, 1
        %s436 = sand.u32 %s106, 1
        %s437 = smul.addr %s436, 64
        %s438 = scalar_lea.vmem [#allocation2], %s437
        // Predicated region
        $region33: #{patch_embed_forward.1} parent=31 // pred_check
          %p439 = pneg %p116
        $region34: #{patch_embed_forward.1} parent=31 // pred_check_branch
          %441 = sbr.rel (%p439) target = $region36
        $region35: #{patch_embed_forward.1} parent=31 // pred_region
          %s442 = smul.u32 16, %s19
          %s443 = ssub.s32 6, %s442
          %s444 = smul.u32 64, %s443
          %p445 = scmp.ne.s32.totalorder 0, %s444
          %s446 = smul.addr %s18, 6
          %s447 = sadd.s32 %s442, %s446
          %s448 = smul.addr %s447, 4
          %s449 = scalar_lea.vmem %s3, %s448
          // Predicated region
          $region37: #{patch_embed_forward.1} parent=35 // pred_check
            %p450 = pneg %p445
          $region38: #{patch_embed_forward.1} parent=35 // pred_check_branch
            %452 = sbr.rel (%p450) target = $region40
          $region39: #{patch_embed_forward.1} parent=35 // pred_region
            // Predicated region
            $region41: #{patch_embed_forward.1} parent=39 // pred_check
              _
            $region42: #{patch_embed_forward.1} parent=39 // pred_check_branch
              %454 = sbr.rel target = $region44
            $region43: #{patch_embed_forward.1} parent=39 // pred_region
              // Predicated region
              $region63: #{patch_embed_forward.1} parent=43 // pred_check
                _
              $region64: #{patch_embed_forward.1} parent=43 // pred_check_branch
                %514 = sbr.rel (0) target = $region66
              $region65: #{patch_embed_forward.1} parent=43 // pred_region
                %s516 = sdiv.u32.pop %s443, 6
                %s517 = srem.u32.pop %s443, 6
                // While loop
                $region67: #{patch_embed_forward.1} parent=65 // loop_pre_header
                  _
                $region68: #{patch_embed_forward.1} parent=65 // loop_header
                  %s519 = sphi 0, %s521
                  %p520 = scmp.ge.s32.totalorder %s519, %s516
                  %s524 = sphi 0, %s541
                  %s525 = sphi %s438, %s544
                  %s526 = sphi %s449, %s545
                $region69: #{patch_embed_forward.1} parent=65 // loop_header_branch
                  %523 = sbr.rel (%p520) target = $region73
                $region70: #{patch_embed_forward.1} parent=65 // loop_body
                  %v527 = vld [vmem:[%s525] sm:$0xf]
                  %528 = vst [vmem:[%s526] sm:$0xf] %v527
                  %v529 = vld [vmem:[%s525 + $0x4] sm:$0xf]
                  %530 = vst [vmem:[%s526 + $0x4] sm:$0xf] %v529
                  %v531 = vld [vmem:[%s525 + $0x8] sm:$0xf]
                  %532 = vst [vmem:[%s526 + $0x8] sm:$0xf] %v531
                  %v533 = vld [vmem:[%s525 + $0xc] sm:$0xf]
                  %534 = vst [vmem:[%s526 + $0xc] sm:$0xf] %v533
                  %v535 = vld [vmem:[%s525 + $0x10] sm:$0xf]
                  %536 = vst [vmem:[%s526 + $0x10] sm:$0xf] %v535
                  %v537 = vld [vmem:[%s525 + $0x14] sm:$0xf]
                  %538 = vst [vmem:[%s526 + $0x14] sm:$0xf] %v537
                  %s539 = sadd.s32 1, %s524
                  %p540 = scmp.ge.s32.totalorder %s539, %s516
                  %s541 = scalar_select %p540, 0, %s539
                  %s542 = smul.u32 %s541, 24
                  %s543 = smul.u32 %s541, 24
                  %s544 = scalar_lea.vmem %s438, %s542 [#allocation2]
                  %s545 = scalar_lea.vmem %s449, %s543
                $region71: #{patch_embed_forward.1} parent=65 // loop_footer
                  %s521 = sadd.s32 %s519, 1
                $region72: #{patch_embed_forward.1} parent=65 // loop_footer_branch
                  %518 = sbr.rel target = $region68
                $region73: #{patch_embed_forward.1} parent=65 // loop_exit
                  _
                %s546 = sdiv.u32.pop %s443, 6
                %s547 = srem.u32.pop %s443, 6
                %s548 = smul.u32 %s546, 6
                %s549 = smul.u32 4, %s548
                %s550 = scalar_lea.vmem %s438, %s549 [#allocation2]
                %s551 = smul.u32 4, %s548
                %s552 = scalar_lea.vmem %s449, %s551
                // While loop
                $region74: #{patch_embed_forward.1} parent=65 // loop_pre_header
                  _
                $region75: #{patch_embed_forward.1} parent=65 // loop_header
                  %s554 = sphi 0, %s556
                  %p555 = scmp.ge.s32.totalorder %s554, %s547
                  %s559 = sphi 0, %s566
                  %s560 = sphi %s550, %s569
                  %s561 = sphi %s552, %s570
                $region76: #{patch_embed_forward.1} parent=65 // loop_header_branch
                  %558 = sbr.rel (%p555) target = $region80
                $region77: #{patch_embed_forward.1} parent=65 // loop_body
                  %v562 = vld [vmem:[%s560] sm:$0xf]
                  %563 = vst [vmem:[%s561] sm:$0xf] %v562
                  %s564 = sadd.s32 1, %s559
                  %p565 = scmp.ge.s32.totalorder %s564, %s547
                  %s566 = scalar_select %p565, 0, %s564
                  %s567 = smul.u32 %s566, 4
                  %s568 = smul.u32 %s566, 4
                  %s569 = scalar_lea.vmem %s550, %s567 [#allocation2]
                  %s570 = scalar_lea.vmem %s552, %s568
                $region78: #{patch_embed_forward.1} parent=65 // loop_footer
                  %s556 = sadd.s32 %s554, 1
                $region79: #{patch_embed_forward.1} parent=65 // loop_footer_branch
                  %553 = sbr.rel target = $region75
                $region80: #{patch_embed_forward.1} parent=65 // loop_exit
                  _
              $region66: #{patch_embed_forward.1} parent=43 // pred_fallthru
                _
            $region44: #{patch_embed_forward.1} parent=39 // pred_fallthru
              _
            // Predicated region
            $region45: #{patch_embed_forward.1} parent=39 // pred_check
              _
            $region46: #{patch_embed_forward.1} parent=39 // pred_check_branch
              %456 = sbr.rel (0) target = $region48
            $region47: #{patch_embed_forward.1} parent=39 // pred_region
              %s458 = sdiv.u32.pop %s443, 6
              %s459 = srem.u32.pop %s443, 6
              // While loop
              $region49: #{patch_embed_forward.1} parent=47 // loop_pre_header
                _
              $region50: #{patch_embed_forward.1} parent=47 // loop_header
                %s461 = sphi 0, %s463
                %p462 = scmp.ge.s32.totalorder %s461, %s458
                %s466 = sphi 0, %s483
                %s467 = sphi %s438, %s486
                %s468 = sphi %s449, %s487
              $region51: #{patch_embed_forward.1} parent=47 // loop_header_branch
                %465 = sbr.rel (%p462) target = $region55
              $region52: #{patch_embed_forward.1} parent=47 // loop_body
                %v469 = vld [vmem:[%s467] sm:$0xf]
                %470 = vst [vmem:[%s468] sm:$0xf] %v469
                %v471 = vld [vmem:[%s467 + $0x4] sm:$0xf]
                %472 = vst [vmem:[%s468 + $0x4] sm:$0xf] %v471
                %v473 = vld [vmem:[%s467 + $0x8] sm:$0xf]
                %474 = vst [vmem:[%s468 + $0x8] sm:$0xf] %v473
                %v475 = vld [vmem:[%s467 + $0xc] sm:$0xf]
                %476 = vst [vmem:[%s468 + $0xc] sm:$0xf] %v475
                %v477 = vld [vmem:[%s467 + $0x10] sm:$0xf]
                %478 = vst [vmem:[%s468 + $0x10] sm:$0xf] %v477
                %v479 = vld [vmem:[%s467 + $0x14] sm:$0xf]
                %480 = vst [vmem:[%s468 + $0x14] sm:$0xf] %v479
                %s481 = sadd.s32 1, %s466
                %p482 = scmp.ge.s32.totalorder %s481, %s458
                %s483 = scalar_select %p482, 0, %s481
                %s484 = smul.u32 %s483, 24
                %s485 = smul.u32 %s483, 24
                %s486 = scalar_lea.vmem %s438, %s484 [#allocation2]
                %s487 = scalar_lea.vmem %s449, %s485
              $region53: #{patch_embed_forward.1} parent=47 // loop_footer
                %s463 = sadd.s32 %s461, 1
              $region54: #{patch_embed_forward.1} parent=47 // loop_footer_branch
                %460 = sbr.rel target = $region50
              $region55: #{patch_embed_forward.1} parent=47 // loop_exit
                _
              %s488 = sdiv.u32.pop %s443, 6
              %s489 = srem.u32.pop %s443, 6
              %s490 = smul.u32 %s488, 6
              %s491 = smul.u32 4, %s490
              %s492 = scalar_lea.vmem %s438, %s491 [#allocation2]
              %s493 = smul.u32 4, %s490
              %s494 = scalar_lea.vmem %s449, %s493
              // While loop
              $region56: #{patch_embed_forward.1} parent=47 // loop_pre_header
                _
              $region57: #{patch_embed_forward.1} parent=47 // loop_header
                %s496 = sphi 0, %s498
                %p497 = scmp.ge.s32.totalorder %s496, %s489
                %s501 = sphi 0, %s508
                %s502 = sphi %s492, %s511
                %s503 = sphi %s494, %s512
              $region58: #{patch_embed_forward.1} parent=47 // loop_header_branch
                %500 = sbr.rel (%p497) target = $region62
              $region59: #{patch_embed_forward.1} parent=47 // loop_body
                %v504 = vld [vmem:[%s502] sm:$0xf]
                %505 = vst [vmem:[%s503] sm:$0xf] %v504
                %s506 = sadd.s32 1, %s501
                %p507 = scmp.ge.s32.totalorder %s506, %s489
                %s508 = scalar_select %p507, 0, %s506
                %s509 = smul.u32 %s508, 4
                %s510 = smul.u32 %s508, 4
                %s511 = scalar_lea.vmem %s492, %s509 [#allocation2]
                %s512 = scalar_lea.vmem %s494, %s510
              $region60: #{patch_embed_forward.1} parent=47 // loop_footer
                %s498 = sadd.s32 %s496, 1
              $region61: #{patch_embed_forward.1} parent=47 // loop_footer_branch
                %495 = sbr.rel target = $region57
              $region62: #{patch_embed_forward.1} parent=47 // loop_exit
                _
            $region48: #{patch_embed_forward.1} parent=39 // pred_fallthru
              _
          $region40: #{patch_embed_forward.1} parent=35 // pred_fallthru
            _
          %571 = vnop
        $region36: #{patch_embed_forward.1} parent=31 // pred_fallthru
          _
      $region32: #{patch_embed_forward.1} parent=5 // pred_fallthru
        _
      %p572 = scmp.le.s32.totalorder 2, %s9
      // Predicated region
      $region81: #{patch_embed_forward.1} parent=5 // pred_check
        %p573 = pneg %p572
      $region82: #{patch_embed_forward.1} parent=5 // pred_check_branch
        %575 = sbr.rel (%p573) target = $region84
      $region83: #{patch_embed_forward.1} parent=5 // pred_region
        %s576 = ssub.s32 %s9, 2
        // Predicated region
        $region85: #{patch_embed_forward.1} parent=83 // pred_check
          %p577 = pneg %p122
        $region86: #{patch_embed_forward.1} parent=83 // pred_check_branch
          %579 = sbr.rel (%p577) target = $region88
        $region87: #{patch_embed_forward.1} parent=83 // pred_region
          %s580 = sand.u32 %s107, 1
          %s581 = sand.u32 %s107, 1
          %s582 = smul.addr %s581, 64
          %s583 = scalar_lea.vmem [#allocation2], %s582
        $region88: #{patch_embed_forward.1} parent=83 // pred_fallthru
          _
      $region84: #{patch_embed_forward.1} parent=5 // pred_fallthru
        _
    $region6: #{patch_embed_forward.1} parent=1 // loop_footer
      %s13 = sadd.s32 1, %s9
    $region7: #{patch_embed_forward.1} parent=1 // loop_footer_branch
      %8 = sbr.rel target = $region3
    $region8: #{patch_embed_forward.1} parent=1 // loop_exit
      _

</llo_original>
